<compile_context>
chip_gen: v5e
topology: v5e:2x2
jax: 0.10.0
libtpu: 0.0.40
codegen_flags: <defaults>
</compile_context>

<pallas_src>
import functools

import jax
import jax.numpy as jnp
from jax.experimental import pallas as pl
from jax.experimental.pallas import tpu as pltpu


def _round_up(x, m):
    return ((x + m - 1) // m) * m


def _actor_kernel(obs_ref, w1_ref, b1_ref, w2_ref, b2_ref, w3_ref, b3_ref,
                  out_ref, *, max_action):
    # Layer 1: Linear + ReLU (MXU matmul, f32 accumulation)
    h = jnp.dot(obs_ref[...], w1_ref[...],
                preferred_element_type=jnp.float32) + b1_ref[...]
    h = jnp.maximum(h, 0.0)
    # Layer 2: Linear + ReLU
    h = jnp.dot(h.astype(w2_ref.dtype), w2_ref[...],
                preferred_element_type=jnp.float32) + b2_ref[...]
    h = jnp.maximum(h, 0.0)
    # Output layer
    a = jnp.dot(h.astype(w3_ref.dtype), w3_ref[...],
                preferred_element_type=jnp.float32) + b3_ref[...]
    # max_action * tanh(a)  (tanh -> EUP, kept in-kernel)
    out_ref[...] = (max_action * jnp.tanh(a)).astype(out_ref.dtype)


def deterministic_actor_forward(obs, params, *, max_action=1.0,
                                block_b=256, compute_dtype=jnp.float32):
    """Returns max_action * tanh(MLP(obs))."""
    w1, b1, w2, b2, w3, b3 = params
    B, in_dim = obs.shape
    hidden = w1.shape[1]
    out_dim = w3.shape[1]

    # Optional bf16 operands (v6e/v7x): halves weight traffic; accumulation
    # stays f32 via preferred_element_type, biases/tail stay f32.
    if compute_dtype != jnp.float32:
        obs = obs.astype(compute_dtype)
        w1 = w1.astype(compute_dtype)
        w2 = w2.astype(compute_dtype)
        w3 = w3.astype(compute_dtype)

    # Batch tile: multiple of 8 (sublane), capped at block_b; pad B up to a
    # multiple of the tile so every grid step sees a full block.
    tb = min(block_b, _round_up(B, 8))
    tb = max(8, (tb // 8) * 8)
    b_pad = _round_up(B, tb)
    if b_pad != B:
        obs = jnp.pad(obs, ((0, b_pad - B), (0, 0)))
    grid = (pl.cdiv(b_pad, tb),)

    obs_spec = pl.BlockSpec((tb, in_dim), lambda i: (i, 0))
    out_spec = pl.BlockSpec((tb, out_dim), lambda i: (i, 0))

    def resident(arr):
        # Full-array block, constant index -> loaded once, held in VMEM.
        return pl.BlockSpec(arr.shape, lambda i: (0, 0))

    kernel = functools.partial(_actor_kernel, max_action=float(max_action))

    out = pl.pallas_call(
        kernel,
        out_shape=jax.ShapeDtypeStruct((b_pad, out_dim), jnp.float32),
        grid=grid,
        in_specs=[obs_spec,
                  resident(w1), resident(b1),
                  resident(w2), resident(b2),
                  resident(w3), resident(b3)],
        out_specs=out_spec,
        compiler_params=pltpu.CompilerParams(
            dimension_semantics=("parallel",)),
    )(obs, w1, b1, w2, b2, w3, b3)

    return out[:B]


def init_params(key, in_dim, out_dim, hidden_dim=256):
    """Deterministic (keyed) init mirroring the MLP trunk shapes.

    Weights are stored (in_features, out_features) so the kernel does
    plain `x @ W + b` (transposed vs. torch.nn.Linear storage)."""
    ks = jax.random.split(key, 6)

    def lin(kw, kb, fan_in, fan_out):
        bound = 1.0 / jnp.sqrt(fan_in)
        w = jax.random.uniform(kw, (fan_in, fan_out), jnp.float32, -bound, bound)
        b = jax.random.uniform(kb, (1, fan_out), jnp.float32, -bound, bound)
        return w, b

    w1, b1 = lin(ks[0], ks[1], in_dim, hidden_dim)
    w2, b2 = lin(ks[2], ks[3], hidden_dim, hidden_dim)
    w3, b3 = lin(ks[4], ks[5], hidden_dim, out_dim)
    return (w1, b1, w2, b2, w3, b3)


def _reference_forward(obs, params, max_action=1.0):
    w1, b1, w2, b2, w3, b3 = params
    h = jnp.maximum(obs @ w1 + b1, 0.0)
    h = jnp.maximum(h @ w2 + b2, 0.0)
    a = h @ w3 + b3
    return max_action * jnp.tanh(a)


if __name__ == "__main__":
    # Small shapes consistent with the module: obs (B, in_dim), action out_dim.
    B, in_dim, action_dim, hidden = 16, 32, 8, 256
    max_action = 1.0

    key = jax.random.PRNGKey(0)
    k_obs, k_params = jax.random.split(key)
    obs = jax.random.normal(k_obs, (B, in_dim), jnp.float32)
    params = init_params(k_params, in_dim, action_dim, hidden)

    # block_b=8 forces a 2-step batch grid even at this tiny demo size so the
    # gridded/pipelined path is exercised; production use would leave the
    # default block_b=256 (multiple of 256 rows for v6e/v7x MXU height).
    act = deterministic_actor_forward(obs, params, max_action=max_action,
                                      block_b=8)
    jax.block_until_ready(act)

    act_ref = _reference_forward(obs, params, max_action)
    assert act.shape == (B, action_dim)
    assert jnp.allclose(act, act_ref, atol=1e-4, rtol=1e-4)

    print("KERNEL_OK")
</pallas_src>

<mosaic_0001>
module attributes {stable_mosaic.version = 11 : i64} {
  func.func @_actor_kernel(%arg0: i32, %arg1: memref<8x32xf32, #tpu.memory_space<vmem>>, %arg2: memref<32x256xf32, #tpu.memory_space<vmem>>, %arg3: memref<1x256xf32, #tpu.memory_space<vmem>>, %arg4: memref<256x256xf32, #tpu.memory_space<vmem>>, %arg5: memref<1x256xf32, #tpu.memory_space<vmem>>, %arg6: memref<256x8xf32, #tpu.memory_space<vmem>>, %arg7: memref<1x8xf32, #tpu.memory_space<vmem>>, %arg8: memref<8x8xf32, #tpu.memory_space<vmem>>) attributes {dimension_semantics = [#tpu.dimension_semantics<parallel>], iteration_bounds = array<i64: 2>, scalar_prefetch = 0 : i64, scratch_operands = 0 : i64, tpu.core_type = #tpu.core_type<tc>, window_params = [{transform_indices = @transform_0, window_bounds = array<i64: 8, 32>}, {pipeline_mode = #tpu.pipeline_mode<synchronous>, transform_indices = @transform_1, window_bounds = array<i64: 32, 256>}, {pipeline_mode = #tpu.pipeline_mode<synchronous>, transform_indices = @transform_2, window_bounds = array<i64: 1, 256>}, {pipeline_mode = #tpu.pipeline_mode<synchronous>, transform_indices = @transform_3, window_bounds = array<i64: 256, 256>}, {pipeline_mode = #tpu.pipeline_mode<synchronous>, transform_indices = @transform_4, window_bounds = array<i64: 1, 256>}, {pipeline_mode = #tpu.pipeline_mode<synchronous>, transform_indices = @transform_5, window_bounds = array<i64: 256, 8>}, {pipeline_mode = #tpu.pipeline_mode<synchronous>, transform_indices = @transform_6, window_bounds = array<i64: 1, 8>}, {transform_indices = @transform_7, window_bounds = array<i64: 8, 8>}]} {
    %c0 = arith.constant 0 : index
    %c0_0 = arith.constant 0 : index
    %0 = vector.load %arg1[%c0, %c0_0] : memref<8x32xf32, #tpu.memory_space<vmem>>, vector<8x32xf32>
    %c0_1 = arith.constant 0 : index
    %c0_2 = arith.constant 0 : index
    %1 = vector.load %arg2[%c0_1, %c0_2] : memref<32x256xf32, #tpu.memory_space<vmem>>, vector<32x256xf32>
    %cst = arith.constant dense<0.000000e+00> : vector<8x256xf32>
    %2 = tpu.matmul %0, %1, %cst {dimension_numbers = #tpu.dot_dimension_numbers<[1], [0], [0], [1], [0, 0, 1, 1], [], []>} : vector<8x32xf32>, vector<32x256xf32>, vector<8x256xf32> -> vector<8x256xf32>
    %c0_3 = arith.constant 0 : index
    %c0_4 = arith.constant 0 : index
    %3 = vector.load %arg3[%c0_3, %c0_4] : memref<1x256xf32, #tpu.memory_space<vmem>>, vector<1x256xf32>
    %4 = vector.broadcast %3 : vector<1x256xf32> to vector<8x256xf32>
    %5 = arith.addf %2, %4 : vector<8x256xf32>
    %cst_5 = arith.constant 0.000000e+00 : f32
    %6 = vector.broadcast %cst_5 : f32 to vector<8x256xf32>
    %7 = arith.maximumf %5, %6 : vector<8x256xf32>
    %c0_6 = arith.constant 0 : index
    %c0_7 = arith.constant 0 : index
    %8 = vector.load %arg4[%c0_6, %c0_7] : memref<256x256xf32, #tpu.memory_space<vmem>>, vector<256x256xf32>
    %cst_8 = arith.constant dense<0.000000e+00> : vector<8x256xf32>
    %9 = tpu.matmul %7, %8, %cst_8 {dimension_numbers = #tpu.dot_dimension_numbers<[1], [0], [0], [1], [0, 0, 1, 1], [], []>} : vector<8x256xf32>, vector<256x256xf32>, vector<8x256xf32> -> vector<8x256xf32>
    %c0_9 = arith.constant 0 : index
    %c0_10 = arith.constant 0 : index
    %10 = vector.load %arg5[%c0_9, %c0_10] : memref<1x256xf32, #tpu.memory_space<vmem>>, vector<1x256xf32>
    %11 = vector.broadcast %10 : vector<1x256xf32> to vector<8x256xf32>
    %12 = arith.addf %9, %11 : vector<8x256xf32>
    %cst_11 = arith.constant 0.000000e+00 : f32
    %13 = vector.broadcast %cst_11 : f32 to vector<8x256xf32>
    %14 = arith.maximumf %12, %13 : vector<8x256xf32>
    %c0_12 = arith.constant 0 : index
    %c0_13 = arith.constant 0 : index
    %15 = vector.load %arg6[%c0_12, %c0_13] : memref<256x8xf32, #tpu.memory_space<vmem>>, vector<256x8xf32>
    %cst_14 = arith.constant dense<0.000000e+00> : vector<8x8xf32>
    %16 = tpu.matmul %14, %15, %cst_14 {dimension_numbers = #tpu.dot_dimension_numbers<[1], [0], [0], [1], [0, 0, 1, 1], [], []>} : vector<8x256xf32>, vector<256x8xf32>, vector<8x8xf32> -> vector<8x8xf32>
    %c0_15 = arith.constant 0 : index
    %c0_16 = arith.constant 0 : index
    %17 = vector.load %arg7[%c0_15, %c0_16] : memref<1x8xf32, #tpu.memory_space<vmem>>, vector<1x8xf32>
    %18 = vector.broadcast %17 : vector<1x8xf32> to vector<8x8xf32>
    %19 = arith.addf %16, %18 : vector<8x8xf32>
    %20 = math.tanh %19 : vector<8x8xf32>
    %cst_17 = arith.constant 1.000000e+00 : f32
    %21 = vector.broadcast %cst_17 : f32 to vector<8x8xf32>
    %22 = arith.mulf %21, %20 : vector<8x8xf32>
    %c0_18 = arith.constant 0 : index
    %c0_19 = arith.constant 0 : index
    %23 = vector.load %arg8[%c0_18, %c0_19] : memref<8x8xf32, #tpu.memory_space<vmem>>, vector<8x8xf32>
    tpu.vector_store %arg8[%c0_18, %c0_19], %22 {strides = array<i32>} : memref<8x8xf32, #tpu.memory_space<vmem>>, vector<8x8xf32>,
    return
  }
  func.func @transform_0(%arg0: i32) -> (i32, i32) {
    %c0_i32 = arith.constant 0 : i32
    %c0_i32_0 = arith.constant 0 : i32
    return %arg0, %c0_i32 : i32, i32
  }
  func.func @transform_1(%arg0: i32) -> (i32, i32) {
    %c0_i32 = arith.constant 0 : i32
    %c0_i32_0 = arith.constant 0 : i32
    %c0_i32_1 = arith.constant 0 : i32
    return %c0_i32, %c0_i32_0 : i32, i32
  }
  func.func @transform_2(%arg0: i32) -> (i32, i32) {
    %c0_i32 = arith.constant 0 : i32
    %c0_i32_0 = arith.constant 0 : i32
    %c0_i32_1 = arith.constant 0 : i32
    return %c0_i32, %c0_i32_0 : i32, i32
  }
  func.func @transform_3(%arg0: i32) -> (i32, i32) {
    %c0_i32 = arith.constant 0 : i32
    %c0_i32_0 = arith.constant 0 : i32
    %c0_i32_1 = arith.constant 0 : i32
    return %c0_i32, %c0_i32_0 : i32, i32
  }
  func.func @transform_4(%arg0: i32) -> (i32, i32) {
    %c0_i32 = arith.constant 0 : i32
    %c0_i32_0 = arith.constant 0 : i32
    %c0_i32_1 = arith.constant 0 : i32
    return %c0_i32, %c0_i32_0 : i32, i32
  }
  func.func @transform_5(%arg0: i32) -> (i32, i32) {
    %c0_i32 = arith.constant 0 : i32
    %c0_i32_0 = arith.constant 0 : i32
    %c0_i32_1 = arith.constant 0 : i32
    return %c0_i32, %c0_i32_0 : i32, i32
  }
  func.func @transform_6(%arg0: i32) -> (i32, i32) {
    %c0_i32 = arith.constant 0 : i32
    %c0_i32_0 = arith.constant 0 : i32
    %c0_i32_1 = arith.constant 0 : i32
    return %c0_i32, %c0_i32_0 : i32, i32
  }
  func.func @transform_7(%arg0: i32) -> (i32, i32) {
    %c0_i32 = arith.constant 0 : i32
    %c0_i32_0 = arith.constant 0 : i32
    return %arg0, %c0_i32 : i32, i32
  }
}

</mosaic_0001>

<llo_original>
// kernel: tpu_custom_call.1
$region0: #{tpu_custom_call.1}
  #allocation0 [shape = 'u32[]', space=smem, size = 0x4, offset = 0x4, fixed_abs, tag = 'smem constant byte address 0x4 - core index']
  #allocation1 [shape = 'u32[72,128]{1,0:T(1,128)}', space=vmem, size = 0x9000, scoped, tag = 'internal scratch']
  %s0 = inlined_call_operand.vmem [shape: f32[16,32], index: 0, kind: input, shape index: {}]
  %s1 = inlined_call_operand.vmem [shape: f32[32,256], index: 1, kind: input, shape index: {}]
  %s2 = inlined_call_operand.vmem [shape: f32[1,256], index: 2, kind: input, shape index: {}]
  %s3 = inlined_call_operand.hbm [shape: f32[256,256], index: 3, kind: input, shape index: {}]
  %s4 = inlined_call_operand.vmem [shape: f32[1,256], index: 4, kind: input, shape index: {}]
  %s5 = inlined_call_operand.vmem [shape: f32[256,8], index: 5, kind: input, shape index: {}]
  %s6 = inlined_call_operand.vmem [shape: f32[1,8], index: 6, kind: input, shape index: {}]
  %s7 = inlined_call_operand.vmem [shape: f32[16,8], index: 7, kind: output, shape index: {}]
  %s8 = sld [smem:[#allocation0]]
  $region65: #{tpu_custom_call.1} parent=0
    _
  %s10 = ssub.s32 1, %s8
  %s11 = scalar_select 0, %s10, %s8
  $region1: #{tpu_custom_call.1} parent=0
    #allocation2 [shape = 'u8[262144]{0}', space=vmem, size = 0x40000, scoped, tag = 'input window, operand 3, single buffered']
    #allocation3 [shape = 's32[2]{0}', space=sflag, size = 0x8, scoped, tag = 'scoped memory for tpu_custom_call.1']
    %12 = vsyncpa [#allocation3], 0
    loop: start=0, step=1, limit=4
    $region2: #{tpu_custom_call.1} parent=1 // loop_pre_header
      _
    $region3: #{tpu_custom_call.1} parent=1 // loop_header
      %s14 = sphi 0, %s18
      %p15 = scmp.ge.s32.totalorder %s14, 4
      %s24 = sphi 0, %s26
      %s27 = sphi 0, %s24
      %s28 = sphi 0, %s27
      %s44 = sphi 0, %s28
      %s48 = sphi 0, %s48
      %s50 = sphi 0, %s48
      %s51 = sphi 0, %s50
      %s65 = sphi 0, %s51
      %s69 = sphi 0, %s69
      %s71 = sphi 0, %s69
      %s72 = sphi 0, %s71
      %s86 = sphi 0, %s72
      %s90 = sphi 0, %s90
      %s92 = sphi 0, %s90
      %s93 = sphi 0, %s92
      %s107 = sphi 0, %s93
      %s111 = sphi 0, %s111
      %s113 = sphi 0, %s111
      %s114 = sphi 0, %s113
      %s128 = sphi 0, %s114
      %s132 = sphi 0, %s132
      %s134 = sphi 0, %s132
      %s135 = sphi 0, %s134
      %s149 = sphi 0, %s135
      %s153 = sphi 0, %s153
      %s155 = sphi 0, %s153
      %s156 = sphi 0, %s155
      %s170 = sphi 0, %s156
      %s176 = sphi 0, %s178
      %s179 = sphi 0, %s176
      %s180 = sphi 0, %s179
      %s196 = sphi 0, %s180
    $region4: #{tpu_custom_call.1} parent=1 // loop_header_branch
      %17 = sbr.rel (%p15) target = $region8
    $region5: #{tpu_custom_call.1} parent=1 // loop_body
      %s19 = ssub.s32 %s14, 1
      %s20 = ssub.s32 %s14, 2
      %s21 = sadd.s32 %s14, 1
      %s22 = ssub.s32 %s14, %s21
      %p23 = scmp.eq.s32.totalorder %s22, 0
      %s25 = sadd.s32 %s24, 1
      %s26 = scalar_select %p23, %s24, %s25
      %p29 = pneg %p23
      %p30 = scmp.eq.s32.totalorder %s14, 1
      %p31 = por %p29, %p30
      %p32 = scmp.ne.s32.totalorder %s24, %s27
      %p33 = scmp.eq.s32.totalorder %s14, 0
      %p34 = por %p32, %p33
      %p35 = scmp.ne.s32.totalorder %s24, %s27
      %p36 = scmp.eq.s32.totalorder %s19, 1
      %p37 = por %p35, %p36
      %p38 = scmp.ne.s32.totalorder %s27, %s28
      %p39 = scmp.eq.s32.totalorder %s19, 0
      %p40 = por %p38, %p39
      %p41 = scmp.ne.s32.totalorder %s27, %s28
      %p42 = scmp.eq.s32.totalorder %s20, 1
      %p43 = por %p41, %p42
      %p45 = scmp.ne.s32.totalorder %s28, %s44
      %p46 = scmp.eq.s32.totalorder %s20, 0
      %p47 = por %p45, %p46
      %s49 = sadd.s32 %s48, 1
      %p52 = scmp.eq.s32.totalorder %s14, 1
      %p53 = scmp.ne.s32.totalorder %s48, %s50
      %p54 = scmp.eq.s32.totalorder %s14, 0
      %p55 = por %p53, %p54
      %p56 = scmp.ne.s32.totalorder %s48, %s50
      %p57 = scmp.eq.s32.totalorder %s19, 1
      %p58 = por %p56, %p57
      %p59 = scmp.ne.s32.totalorder %s50, %s51
      %p60 = scmp.eq.s32.totalorder %s19, 0
      %p61 = por %p59, %p60
      %p62 = scmp.ne.s32.totalorder %s50, %s51
      %p63 = scmp.eq.s32.totalorder %s20, 1
      %p64 = por %p62, %p63
      %p66 = scmp.ne.s32.totalorder %s51, %s65
      %p67 = scmp.eq.s32.totalorder %s20, 0
      %p68 = por %p66, %p67
      %s70 = sadd.s32 %s69, 1
      %p73 = scmp.eq.s32.totalorder %s14, 1
      %p74 = scmp.ne.s32.totalorder %s69, %s71
      %p75 = scmp.eq.s32.totalorder %s14, 0
      %p76 = por %p74, %p75
      %p77 = scmp.ne.s32.totalorder %s69, %s71
      %p78 = scmp.eq.s32.totalorder %s19, 1
      %p79 = por %p77, %p78
      %p80 = scmp.ne.s32.totalorder %s71, %s72
      %p81 = scmp.eq.s32.totalorder %s19, 0
      %p82 = por %p80, %p81
      %p83 = scmp.ne.s32.totalorder %s71, %s72
      %p84 = scmp.eq.s32.totalorder %s20, 1
      %p85 = por %p83, %p84
      %p87 = scmp.ne.s32.totalorder %s72, %s86
      %p88 = scmp.eq.s32.totalorder %s20, 0
      %p89 = por %p87, %p88
      %s91 = sadd.s32 %s90, 1
      %p94 = scmp.eq.s32.totalorder %s14, 1
      %p95 = scmp.ne.s32.totalorder %s90, %s92
      %p96 = scmp.eq.s32.totalorder %s14, 0
      %p97 = por %p95, %p96
      %p98 = scmp.ne.s32.totalorder %s90, %s92
      %p99 = scmp.eq.s32.totalorder %s19, 1
      %p100 = por %p98, %p99
      %p101 = scmp.ne.s32.totalorder %s92, %s93
      %p102 = scmp.eq.s32.totalorder %s19, 0
      %p103 = por %p101, %p102
      %p104 = scmp.ne.s32.totalorder %s92, %s93
      %p105 = scmp.eq.s32.totalorder %s20, 1
      %p106 = por %p104, %p105
      %p108 = scmp.ne.s32.totalorder %s93, %s107
      %p109 = scmp.eq.s32.totalorder %s20, 0
      %p110 = por %p108, %p109
      %s112 = sadd.s32 %s111, 1
      %p115 = scmp.eq.s32.totalorder %s14, 1
      %p116 = scmp.ne.s32.totalorder %s111, %s113
      %p117 = scmp.eq.s32.totalorder %s14, 0
      %p118 = por %p116, %p117
      %p119 = scmp.ne.s32.totalorder %s111, %s113
      %p120 = scmp.eq.s32.totalorder %s19, 1
      %p121 = por %p119, %p120
      %p122 = scmp.ne.s32.totalorder %s113, %s114
      %p123 = scmp.eq.s32.totalorder %s19, 0
      %p124 = por %p122, %p123
      %p125 = scmp.ne.s32.totalorder %s113, %s114
      %p126 = scmp.eq.s32.totalorder %s20, 1
      %p127 = por %p125, %p126
      %p129 = scmp.ne.s32.totalorder %s114, %s128
      %p130 = scmp.eq.s32.totalorder %s20, 0
      %p131 = por %p129, %p130
      %s133 = sadd.s32 %s132, 1
      %p136 = scmp.eq.s32.totalorder %s14, 1
      %p137 = scmp.ne.s32.totalorder %s132, %s134
      %p138 = scmp.eq.s32.totalorder %s14, 0
      %p139 = por %p137, %p138
      %p140 = scmp.ne.s32.totalorder %s132, %s134
      %p141 = scmp.eq.s32.totalorder %s19, 1
      %p142 = por %p140, %p141
      %p143 = scmp.ne.s32.totalorder %s134, %s135
      %p144 = scmp.eq.s32.totalorder %s19, 0
      %p145 = por %p143, %p144
      %p146 = scmp.ne.s32.totalorder %s134, %s135
      %p147 = scmp.eq.s32.totalorder %s20, 1
      %p148 = por %p146, %p147
      %p150 = scmp.ne.s32.totalorder %s135, %s149
      %p151 = scmp.eq.s32.totalorder %s20, 0
      %p152 = por %p150, %p151
      %s154 = sadd.s32 %s153, 1
      %p157 = scmp.eq.s32.totalorder %s14, 1
      %p158 = scmp.ne.s32.totalorder %s153, %s155
      %p159 = scmp.eq.s32.totalorder %s14, 0
      %p160 = por %p158, %p159
      %p161 = scmp.ne.s32.totalorder %s153, %s155
      %p162 = scmp.eq.s32.totalorder %s19, 1
      %p163 = por %p161, %p162
      %p164 = scmp.ne.s32.totalorder %s155, %s156
      %p165 = scmp.eq.s32.totalorder %s19, 0
      %p166 = por %p164, %p165
      %p167 = scmp.ne.s32.totalorder %s155, %s156
      %p168 = scmp.eq.s32.totalorder %s20, 1
      %p169 = por %p167, %p168
      %p171 = scmp.ne.s32.totalorder %s156, %s170
      %p172 = scmp.eq.s32.totalorder %s20, 0
      %p173 = por %p171, %p172
      %s174 = ssub.s32 %s14, %s21
      %p175 = scmp.eq.s32.totalorder %s174, 0
      %s177 = sadd.s32 %s176, 1
      %s178 = scalar_select %p175, %s176, %s177
      %p181 = pneg %p175
      %p182 = scmp.eq.s32.totalorder %s14, 1
      %p183 = por %p181, %p182
      %p184 = scmp.ne.s32.totalorder %s176, %s179
      %p185 = scmp.eq.s32.totalorder %s14, 0
      %p186 = por %p184, %p185
      %p187 = scmp.ne.s32.totalorder %s176, %s179
      %p188 = scmp.eq.s32.totalorder %s19, 1
      %p189 = por %p187, %p188
      %p190 = scmp.ne.s32.totalorder %s179, %s180
      %p191 = scmp.eq.s32.totalorder %s19, 0
      %p192 = por %p190, %p191
      %p193 = scmp.ne.s32.totalorder %s179, %s180
      %p194 = scmp.eq.s32.totalorder %s20, 1
      %p195 = por %p193, %p194
      %p197 = scmp.ne.s32.totalorder %s180, %s196
      %p198 = scmp.eq.s32.totalorder %s20, 0
      %p199 = por %p197, %p198
      %p200 = scmp.le.s32.totalorder 1, %s14
      %p201 = scmp.lt.s32.totalorder %s14, 3
      %p202 = pnand %p200, %p201
      %p203 = pneg %p202
      // Predicated region
      $region9: #{tpu_custom_call.1} parent=5 // pred_check
        _
      $region10: #{tpu_custom_call.1} parent=5 // pred_check_branch
        %205 = sbr.rel (%p202) target = $region12
      $region11: #{tpu_custom_call.1} parent=5 // pred_region
        %s206 = ssub.s32 %s14, 1
        // Predicated region
        $region13: #{tpu_custom_call.1} parent=11 // pred_check
          %p207 = pneg %p61
        $region14: #{tpu_custom_call.1} parent=11 // pred_check_branch
          %209 = sbr.rel (%p207) target = $region16
        $region15: #{tpu_custom_call.1} parent=11 // pred_region
          _
        $region16: #{tpu_custom_call.1} parent=11 // pred_fallthru
          _
        // Predicated region
        $region17: #{tpu_custom_call.1} parent=11 // pred_check
          %p210 = pneg %p82
        $region18: #{tpu_custom_call.1} parent=11 // pred_check_branch
          %212 = sbr.rel (%p210) target = $region20
        $region19: #{tpu_custom_call.1} parent=11 // pred_region
          _
        $region20: #{tpu_custom_call.1} parent=11 // pred_fallthru
          _
        // Predicated region
        $region21: #{tpu_custom_call.1} parent=11 // pred_check
          %p213 = pneg %p103
        $region22: #{tpu_custom_call.1} parent=11 // pred_check_branch
          %215 = sbr.rel (%p213) target = $region24
        $region23: #{tpu_custom_call.1} parent=11 // pred_region
          %217 = vsyncadd [#allocation3], 0
          %s218 = sshll.u32 %s3, 4
          %s219 = int_to_ptr.hbm [resolvable:$true] %s218
          %s220 = sshll.u32 [#allocation2], 4
          %s221 = int_to_ptr.vmem [resolvable:$true] %s220
          %226 = dma.hbm_to_vmem [thread:$0]  %s219, 8192, %s221, [#allocation3], 256, 256, 16
        $region24: #{tpu_custom_call.1} parent=11 // pred_fallthru
          _
        // Predicated region
        $region25: #{tpu_custom_call.1} parent=11 // pred_check
          %p227 = pneg %p124
        $region26: #{tpu_custom_call.1} parent=11 // pred_check_branch
          %229 = sbr.rel (%p227) target = $region28
        $region27: #{tpu_custom_call.1} parent=11 // pred_region
          _
        $region28: #{tpu_custom_call.1} parent=11 // pred_fallthru
          _
        // Predicated region
        $region29: #{tpu_custom_call.1} parent=11 // pred_check
          %p230 = pneg %p145
        $region30: #{tpu_custom_call.1} parent=11 // pred_check_branch
          %232 = sbr.rel (%p230) target = $region32
        $region31: #{tpu_custom_call.1} parent=11 // pred_region
          _
        $region32: #{tpu_custom_call.1} parent=11 // pred_fallthru
          _
        // Predicated region
        $region33: #{tpu_custom_call.1} parent=11 // pred_check
          %p233 = pneg %p166
        $region34: #{tpu_custom_call.1} parent=11 // pred_check_branch
          %235 = sbr.rel (%p233) target = $region36
        $region35: #{tpu_custom_call.1} parent=11 // pred_region
          _
        $region36: #{tpu_custom_call.1} parent=11 // pred_fallthru
          _
      $region12: #{tpu_custom_call.1} parent=5 // pred_fallthru
        _
      %p236 = scmp.lt.s32.totalorder %s14, 2
      // Predicated region
      $region37: #{tpu_custom_call.1} parent=5 // pred_check
        %p237 = pneg %p236
      $region38: #{tpu_custom_call.1} parent=5 // pred_check_branch
        %239 = sbr.rel (%p237) target = $region40
      $region39: #{tpu_custom_call.1} parent=5 // pred_region
        // Predicated region
        $region41: #{tpu_custom_call.1} parent=39 // pred_check
          %p240 = pneg %p34
        $region42: #{tpu_custom_call.1} parent=39 // pred_check_branch
          %242 = sbr.rel (%p240) target = $region44
        $region43: #{tpu_custom_call.1} parent=39 // pred_region
          %p243 = scmp.lt.s32.totalorder %s14, 1
          %s244 = scalar_select %p243, %s14, 1
          %s245 = smul.addr %s244, 8
          %s246 = scalar_lea.vmem %s0, %s245
        $region44: #{tpu_custom_call.1} parent=39 // pred_fallthru
          _
      $region40: #{tpu_custom_call.1} parent=5 // pred_fallthru
        _
      %p247 = scmp.le.s32.totalorder 1, %s14
      %p248 = scmp.lt.s32.totalorder %s14, 3
      %p249 = pnand %p247, %p248
      %p250 = pneg %p249
      // Predicated region
      $region45: #{tpu_custom_call.1} parent=5 // pred_check
        _
      $region46: #{tpu_custom_call.1} parent=5 // pred_check_branch
        %252 = sbr.rel (%p249) target = $region48
      $region47: #{tpu_custom_call.1} parent=5 // pred_region
        %s253 = ssub.s32 %s14, 1
        // Predicated region
        $region49: #{tpu_custom_call.1} parent=47 // pred_check
          %p254 = pneg %p103
        $region50: #{tpu_custom_call.1} parent=47 // pred_check_branch
          %256 = sbr.rel (%p254) target = $region52
        $region51: #{tpu_custom_call.1} parent=47 // pred_region
          %258 = dma.done [#allocation3], 8192
        $region52: #{tpu_custom_call.1} parent=47 // pred_fallthru
          _
        %p259 = scmp.lt.s32.totalorder %s19, 1
        %s260 = scalar_select %p259, %s19, 1
        %s261 = smul.addr %s260, 8
        %s262 = scalar_lea.vmem %s0, %s261
        %p263 = pneg %p40
        %p264 = pneg %p37
        %p265 = pneg %p61
        %p266 = pneg %p58
        %p267 = pneg %p82
        %p268 = pneg %p79
        %p269 = pneg %p103
        %p270 = pneg %p100
        %p271 = pneg %p124
        %p272 = pneg %p121
        %p273 = pneg %p145
        %p274 = pneg %p142
        %p275 = pneg %p166
        %p276 = pneg %p163
        %p277 = pneg %p192
        %p278 = pneg %p189
        %p279 = scmp.lt.s32.totalorder %s19, 1
        %s280 = scalar_select %p279, %s19, 1
        %s281 = smul.addr %s280, 8
        %s282 = scalar_lea.vmem %s7, %s281
        %p283 = scmp.lt.s32.totalorder %s19, 1
        %s284 = scalar_select %p283, %s19, 1
        %s285 = smul.addr %s284, 8
        %s286 = scalar_lea.vmem %s0, %s285
        %p287 = scmp.lt.s32.totalorder %s19, 1
        %s288 = scalar_select %p287, %s19, 1
        %s289 = smul.addr %s288, 8
        %s290 = scalar_lea.vmem %s7, %s289
        %v291 = vld [vmem:[%s286] sm:$0xff]
        %v292 = vld [vmem:[%s1] sm:$0xff]
        %v293 = vld [vmem:[%s1 + $0x8] sm:$0xff]
        %v294 = vld [vmem:[%s1 + $0x10] sm:$0xff]
        %v295 = vld [vmem:[%s1 + $0x18] sm:$0xff]
        %v296 = vld [vmem:[%s1 + $0x20] sm:$0xff]
        %v297 = vld [vmem:[%s1 + $0x28] sm:$0xff]
        %v298 = vld [vmem:[%s1 + $0x30] sm:$0xff]
        %v299 = vld [vmem:[%s1 + $0x38] sm:$0xff]
        %v300 = vld [vmem:[%s2] sm:$0x3]
        %v302 = vperm.slane %v300, 0
        %v303 = vperm.slane %v300, 1
        %vm306 = vcmask 261120
        %v308 = vsel %vm306, %v291, 0
        %310 = vmatpush.msra.mxu0 0.0
        %311 = vmatpush.msra.mxu0 0.0
        %312 = vmatpush.msra.mxu0 0.0
        %313 = vmatpush.msra.mxu0 0.0
        %314 = vmatpush.msra.mxu0 0.0
        %315 = vmatpush.msra.mxu0 0.0
        %316 = vmatpush.msra.mxu0 0.0
        %317 = vmatpush.msra.mxu0 0.0
        %318 = vmatpush.msra.mxu0 0.0
        %319 = vmatpush.msra.mxu0 0.0
        %320 = vmatpush.msra.mxu0 0.0
        %321 = vmatpush.msra.mxu0 0.0
        %322 = vmatpush.msra.mxu0 %v298
        %323 = vmatpush.msra.mxu0 %v296
        %324 = vmatpush.msra.mxu0 %v294
        %325 = vmatpush.msra.mxu0 %v292
        %326 = vmatmul.f32.gmra.mxu0 %v308
        %v327 = vpop.f32.mrf.mxu0
        %v328 = vadd.f32 %v302, %v327
        %329 = vdwg.mxu0
        %330 = vmatpush.msra.mxu0 0.0
        %331 = vmatpush.msra.mxu0 0.0
        %332 = vmatpush.msra.mxu0 0.0
        %333 = vmatpush.msra.mxu0 0.0
        %334 = vmatpush.msra.mxu0 0.0
        %335 = vmatpush.msra.mxu0 0.0
        %336 = vmatpush.msra.mxu0 0.0
        %337 = vmatpush.msra.mxu0 0.0
        %338 = vmatpush.msra.mxu0 0.0
        %339 = vmatpush.msra.mxu0 0.0
        %340 = vmatpush.msra.mxu0 0.0
        %341 = vmatpush.msra.mxu0 0.0
        %342 = vmatpush.msra.mxu0 %v299
        %343 = vmatpush.msra.mxu0 %v297
        %344 = vmatpush.msra.mxu0 %v295
        %345 = vmatpush.msra.mxu0 %v293
        %346 = vmatmul.f32.gmra.mxu0 %v308
        %v347 = vpop.f32.mrf.mxu0
        %v348 = vadd.f32 %v303, %v347
        %349 = vdwg.mxu0
        %v350 = vmax.f32 %v328, 0.0
        %v351 = vmax.f32 %v348, 0.0
        %v352 = vld [vmem:[#allocation2] sm:$0xff]
        %v353 = vld [vmem:[#allocation2 + $0x8] sm:$0xff]
        %v354 = vld [vmem:[#allocation2 + $0x10] sm:$0xff]
        %v355 = vld [vmem:[#allocation2 + $0x18] sm:$0xff]
        %v356 = vld [vmem:[#allocation2 + $0x20] sm:$0xff]
        %v357 = vld [vmem:[#allocation2 + $0x28] sm:$0xff]
        %v358 = vld [vmem:[#allocation2 + $0x30] sm:$0xff]
        %v359 = vld [vmem:[#allocation2 + $0x38] sm:$0xff]
        %v360 = vld [vmem:[#allocation2 + $0x40] sm:$0xff]
        %v361 = vld [vmem:[#allocation2 + $0x48] sm:$0xff]
        %v362 = vld [vmem:[#allocation2 + $0x50] sm:$0xff]
        %v363 = vld [vmem:[#allocation2 + $0x58] sm:$0xff]
        %v364 = vld [vmem:[#allocation2 + $0x60] sm:$0xff]
        %v365 = vld [vmem:[#allocation2 + $0x68] sm:$0xff]
        %v366 = vld [vmem:[#allocation2 + $0x70] sm:$0xff]
        %v367 = vld [vmem:[#allocation2 + $0x78] sm:$0xff]
        %v368 = vld [vmem:[#allocation2 + $0x80] sm:$0xff]
        %v369 = vld [vmem:[#allocation2 + $0x88] sm:$0xff]
        %v370 = vld [vmem:[#allocation2 + $0x90] sm:$0xff]
        %v371 = vld [vmem:[#allocation2 + $0x98] sm:$0xff]
        %v372 = vld [vmem:[#allocation2 + $0xa0] sm:$0xff]
        %v373 = vld [vmem:[#allocation2 + $0xa8] sm:$0xff]
        %v374 = vld [vmem:[#allocation2 + $0xb0] sm:$0xff]
        %v375 = vld [vmem:[#allocation2 + $0xb8] sm:$0xff]
        %v376 = vld [vmem:[#allocation2 + $0xc0] sm:$0xff]
        %v377 = vld [vmem:[#allocation2 + $0xc8] sm:$0xff]
        %v378 = vld [vmem:[#allocation2 + $0xd0] sm:$0xff]
        %v379 = vld [vmem:[#allocation2 + $0xd8] sm:$0xff]
        %v380 = vld [vmem:[#allocation2 + $0xe0] sm:$0xff]
        %v381 = vld [vmem:[#allocation2 + $0xe8] sm:$0xff]
        %v382 = vld [vmem:[#allocation2 + $0xf0] sm:$0xff]
        %v383 = vld [vmem:[#allocation2 + $0xf8] sm:$0xff]
        %v384 = vld [vmem:[#allocation2 + $0x100] sm:$0xff]
        %v385 = vld [vmem:[#allocation2 + $0x108] sm:$0xff]
        %v386 = vld [vmem:[#allocation2 + $0x110] sm:$0xff]
        %v387 = vld [vmem:[#allocation2 + $0x118] sm:$0xff]
        %v388 = vld [vmem:[#allocation2 + $0x120] sm:$0xff]
        %v389 = vld [vmem:[#allocation2 + $0x128] sm:$0xff]
        %v390 = vld [vmem:[#allocation2 + $0x130] sm:$0xff]
        %v391 = vld [vmem:[#allocation2 + $0x138] sm:$0xff]
        %v392 = vld [vmem:[#allocation2 + $0x140] sm:$0xff]
        %v393 = vld [vmem:[#allocation2 + $0x148] sm:$0xff]
        %v394 = vld [vmem:[#allocation2 + $0x150] sm:$0xff]
        %v395 = vld [vmem:[#allocation2 + $0x158] sm:$0xff]
        %v396 = vld [vmem:[#allocation2 + $0x160] sm:$0xff]
        %v397 = vld [vmem:[#allocation2 + $0x168] sm:$0xff]
        %v398 = vld [vmem:[#allocation2 + $0x170] sm:$0xff]
        %v399 = vld [vmem:[#allocation2 + $0x178] sm:$0xff]
        %v400 = vld [vmem:[#allocation2 + $0x180] sm:$0xff]
        %v401 = vld [vmem:[#allocation2 + $0x188] sm:$0xff]
        %v402 = vld [vmem:[#allocation2 + $0x190] sm:$0xff]
        %v403 = vld [vmem:[#allocation2 + $0x198] sm:$0xff]
        %v404 = vld [vmem:[#allocation2 + $0x1a0] sm:$0xff]
        %v405 = vld [vmem:[#allocation2 + $0x1a8] sm:$0xff]
        %v406 = vld [vmem:[#allocation2 + $0x1b0] sm:$0xff]
        %v407 = vld [vmem:[#allocation2 + $0x1b8] sm:$0xff]
        %v408 = vld [vmem:[#allocation2 + $0x1c0] sm:$0xff]
        %v409 = vld [vmem:[#allocation2 + $0x1c8] sm:$0xff]
        %v410 = vld [vmem:[#allocation2 + $0x1d0] sm:$0xff]
        %v411 = vld [vmem:[#allocation2 + $0x1d8] sm:$0xff]
        %v412 = vld [vmem:[#allocation2 + $0x1e0] sm:$0xff]
        %v413 = vld [vmem:[#allocation2 + $0x1e8] sm:$0xff]
        %v414 = vld [vmem:[#allocation2 + $0x1f0] sm:$0xff]
        %v415 = vld [vmem:[#allocation2 + $0x1f8] sm:$0xff]
        %v416 = vld [vmem:[%s4] sm:$0x3]
        %v418 = vperm.slane %v416, 0
        %v419 = vperm.slane %v416, 1
        %422 = vmatpush.msra.mxu0 %v382
        %423 = vmatpush.msra.mxu0 %v380
        %424 = vmatpush.msra.mxu0 %v378
        %425 = vmatpush.msra.mxu0 %v376
        %426 = vmatpush.msra.mxu0 %v374
        %427 = vmatpush.msra.mxu0 %v372
        %428 = vmatpush.msra.mxu0 %v370
        %429 = vmatpush.msra.mxu0 %v368
        %430 = vmatpush.msra.mxu0 %v366
        %431 = vmatpush.msra.mxu0 %v364
        %432 = vmatpush.msra.mxu0 %v362
        %433 = vmatpush.msra.mxu0 %v360
        %434 = vmatpush.msra.mxu0 %v358
        %435 = vmatpush.msra.mxu0 %v356
        %436 = vmatpush.msra.mxu0 %v354
        %437 = vmatpush.msra.mxu0 %v352
        %438 = vmatmul.f32.gmra.mxu0 %v350
        %v439 = vpop.f32.mrf.mxu0
        %v440 = vadd.f32 %v418, %v439
        %441 = vdwg.mxu0
        %442 = vmatpush.msra.mxu0 %v414
        %443 = vmatpush.msra.mxu0 %v412
        %444 = vmatpush.msra.mxu0 %v410
        %445 = vmatpush.msra.mxu0 %v408
        %446 = vmatpush.msra.mxu0 %v406
        %447 = vmatpush.msra.mxu0 %v404
        %448 = vmatpush.msra.mxu0 %v402
        %449 = vmatpush.msra.mxu0 %v400
        %450 = vmatpush.msra.mxu0 %v398
        %451 = vmatpush.msra.mxu0 %v396
        %452 = vmatpush.msra.mxu0 %v394
        %453 = vmatpush.msra.mxu0 %v392
        %454 = vmatpush.msra.mxu0 %v390
        %455 = vmatpush.msra.mxu0 %v388
        %456 = vmatpush.msra.mxu0 %v386
        %457 = vmatpush.msra.mxu0 %v384
        %458 = vmatmul.f32.gmra.mxu0 %v351
        %v459 = vpop.f32.mrf.mxu0
        %v460 = vadd.f32 %v440, %v459
        %461 = vdwg.mxu0
        %462 = vmatpush.msra.mxu0 %v383
        %463 = vmatpush.msra.mxu0 %v381
        %464 = vmatpush.msra.mxu0 %v379
        %465 = vmatpush.msra.mxu0 %v377
        %466 = vmatpush.msra.mxu0 %v375
        %467 = vmatpush.msra.mxu0 %v373
        %468 = vmatpush.msra.mxu0 %v371
        %469 = vmatpush.msra.mxu0 %v369
        %470 = vmatpush.msra.mxu0 %v367
        %471 = vmatpush.msra.mxu0 %v365
        %472 = vmatpush.msra.mxu0 %v363
        %473 = vmatpush.msra.mxu0 %v361
        %474 = vmatpush.msra.mxu0 %v359
        %475 = vmatpush.msra.mxu0 %v357
        %476 = vmatpush.msra.mxu0 %v355
        %477 = vmatpush.msra.mxu0 %v353
        %478 = vmatmul.f32.gmra.mxu0 %v350
        %v479 = vpop.f32.mrf.mxu0
        %v480 = vadd.f32 %v419, %v479
        %481 = vdwg.mxu0
        %482 = vmatpush.msra.mxu0 %v415
        %483 = vmatpush.msra.mxu0 %v413
        %484 = vmatpush.msra.mxu0 %v411
        %485 = vmatpush.msra.mxu0 %v409
        %486 = vmatpush.msra.mxu0 %v407
        %487 = vmatpush.msra.mxu0 %v405
        %488 = vmatpush.msra.mxu0 %v403
        %489 = vmatpush.msra.mxu0 %v401
        %490 = vmatpush.msra.mxu0 %v399
        %491 = vmatpush.msra.mxu0 %v397
        %492 = vmatpush.msra.mxu0 %v395
        %493 = vmatpush.msra.mxu0 %v393
        %494 = vmatpush.msra.mxu0 %v391
        %495 = vmatpush.msra.mxu0 %v389
        %496 = vmatpush.msra.mxu0 %v387
        %497 = vmatpush.msra.mxu0 %v385
        %498 = vmatmul.f32.gmra.mxu0 %v351
        %v499 = vpop.f32.mrf.mxu0
        %v500 = vadd.f32 %v480, %v499
        %501 = vdwg.mxu0
        %v502 = vmax.f32 %v460, 0.0
        %v503 = vmax.f32 %v500, 0.0
        %v504 = vld [vmem:[%s5] sm:$0xff]
        %v505 = vld [vmem:[%s5 + $0x8] sm:$0xff]
        %v506 = vld [vmem:[%s5 + $0x10] sm:$0xff]
        %v507 = vld [vmem:[%s5 + $0x18] sm:$0xff]
        %v508 = vld [vmem:[%s5 + $0x20] sm:$0xff]
        %v509 = vld [vmem:[%s5 + $0x28] sm:$0xff]
        %v510 = vld [vmem:[%s5 + $0x30] sm:$0xff]
        %v511 = vld [vmem:[%s5 + $0x38] sm:$0xff]
        %v512 = vld [vmem:[%s5 + $0x40] sm:$0xff]
        %v513 = vld [vmem:[%s5 + $0x48] sm:$0xff]
        %v514 = vld [vmem:[%s5 + $0x50] sm:$0xff]
        %v515 = vld [vmem:[%s5 + $0x58] sm:$0xff]
        %v516 = vld [vmem:[%s5 + $0x60] sm:$0xff]
        %v517 = vld [vmem:[%s5 + $0x68] sm:$0xff]
        %v518 = vld [vmem:[%s5 + $0x70] sm:$0xff]
        %v519 = vld [vmem:[%s5 + $0x78] sm:$0xff]
        %v520 = vld [vmem:[%s5 + $0x80] sm:$0xff]
        %v521 = vld [vmem:[%s5 + $0x88] sm:$0xff]
        %v522 = vld [vmem:[%s5 + $0x90] sm:$0xff]
        %v523 = vld [vmem:[%s5 + $0x98] sm:$0xff]
        %v524 = vld [vmem:[%s5 + $0xa0] sm:$0xff]
        %v525 = vld [vmem:[%s5 + $0xa8] sm:$0xff]
        %v526 = vld [vmem:[%s5 + $0xb0] sm:$0xff]
        %v527 = vld [vmem:[%s5 + $0xb8] sm:$0xff]
        %v528 = vld [vmem:[%s5 + $0xc0] sm:$0xff]
        %v529 = vld [vmem:[%s5 + $0xc8] sm:$0xff]
        %v530 = vld [vmem:[%s5 + $0xd0] sm:$0xff]
        %v531 = vld [vmem:[%s5 + $0xd8] sm:$0xff]
        %v532 = vld [vmem:[%s5 + $0xe0] sm:$0xff]
        %v533 = vld [vmem:[%s5 + $0xe8] sm:$0xff]
        %v534 = vld [vmem:[%s5 + $0xf0] sm:$0xff]
        %v535 = vld [vmem:[%s5 + $0xf8] sm:$0xff]
        %v536 = vld [vmem:[%s6] sm:$0x1]
        %v538 = vperm.slane %v536, 0
        %540 = vmatpush.msra.mxu0 %v519
        %541 = vmatpush.msra.mxu0 %v518
        %542 = vmatpush.msra.mxu0 %v517
        %543 = vmatpush.msra.mxu0 %v516
        %544 = vmatpush.msra.mxu0 %v515
        %545 = vmatpush.msra.mxu0 %v514
        %546 = vmatpush.msra.mxu0 %v513
        %547 = vmatpush.msra.mxu0 %v512
        %548 = vmatpush.msra.mxu0 %v511
        %549 = vmatpush.msra.mxu0 %v510
        %550 = vmatpush.msra.mxu0 %v509
        %551 = vmatpush.msra.mxu0 %v508
        %552 = vmatpush.msra.mxu0 %v507
        %553 = vmatpush.msra.mxu0 %v506
        %554 = vmatpush.msra.mxu0 %v505
        %555 = vmatpush.msra.mxu0 %v504
        %556 = vmatmul.f32.gmra.mxu0 %v502
        %v557 = vpop.f32.mrf.mxu0
        %v558 = vadd.f32 %v538, %v557
        %559 = vdwg.mxu0
        %560 = vmatpush.msra.mxu0 %v535
        %561 = vmatpush.msra.mxu0 %v534
        %562 = vmatpush.msra.mxu0 %v533
        %563 = vmatpush.msra.mxu0 %v532
        %564 = vmatpush.msra.mxu0 %v531
        %565 = vmatpush.msra.mxu0 %v530
        %566 = vmatpush.msra.mxu0 %v529
        %567 = vmatpush.msra.mxu0 %v528
        %568 = vmatpush.msra.mxu0 %v527
        %569 = vmatpush.msra.mxu0 %v526
        %570 = vmatpush.msra.mxu0 %v525
        %571 = vmatpush.msra.mxu0 %v524
        %572 = vmatpush.msra.mxu0 %v523
        %573 = vmatpush.msra.mxu0 %v522
        %574 = vmatpush.msra.mxu0 %v521
        %575 = vmatpush.msra.mxu0 %v520
        %576 = vmatmul.f32.gmra.mxu0 %v503
        %v577 = vpop.f32.mrf.mxu0
        %v578 = vadd.f32 %v558, %v577
        %579 = vdwg.mxu0
        %v580 = vtanh.pop %v578
        %vm581 = vcmask 64512
        %582 = vst.msk [vmem:[%s290] sm:$0xff] %vm581, %v580
        %p583 = scmp.lt.s32.totalorder %s19, 1
        %s584 = scalar_select %p583, %s19, 1
        %s585 = smul.addr %s584, 8
        %s586 = scalar_lea.vmem %s7, %s585
        // Predicated region
        $region53: #{tpu_custom_call.1} parent=47 // pred_check
          %p587 = pneg %p189
        $region54: #{tpu_custom_call.1} parent=47 // pred_check_branch
          %589 = sbr.rel (%p587) target = $region56
        $region55: #{tpu_custom_call.1} parent=47 // pred_region
          _
        $region56: #{tpu_custom_call.1} parent=47 // pred_fallthru
          _
      $region48: #{tpu_custom_call.1} parent=5 // pred_fallthru
        _
      %p590 = scmp.le.s32.totalorder 2, %s14
      // Predicated region
      $region57: #{tpu_custom_call.1} parent=5 // pred_check
        %p591 = pneg %p590
      $region58: #{tpu_custom_call.1} parent=5 // pred_check_branch
        %593 = sbr.rel (%p591) target = $region60
      $region59: #{tpu_custom_call.1} parent=5 // pred_region
        %s594 = ssub.s32 %s14, 2
        // Predicated region
        $region61: #{tpu_custom_call.1} parent=59 // pred_check
          %p595 = pneg %p195
        $region62: #{tpu_custom_call.1} parent=59 // pred_check_branch
          %597 = sbr.rel (%p595) target = $region64
        $region63: #{tpu_custom_call.1} parent=59 // pred_region
          %p598 = scmp.lt.s32.totalorder %s20, 1
          %s599 = scalar_select %p598, %s20, 1
          %s600 = smul.addr %s599, 8
          %s601 = scalar_lea.vmem %s7, %s600
        $region64: #{tpu_custom_call.1} parent=59 // pred_fallthru
          _
      $region60: #{tpu_custom_call.1} parent=5 // pred_fallthru
        _
    $region6: #{tpu_custom_call.1} parent=1 // loop_footer
      %s18 = sadd.s32 1, %s14
    $region7: #{tpu_custom_call.1} parent=1 // loop_footer_branch
      %13 = sbr.rel target = $region3
    $region8: #{tpu_custom_call.1} parent=1 // loop_exit
      _
    %602 = vsyncpa [#allocation3], 1
    %s603 = scalar_lea.sflag [#allocation3], 1
    %604 = vsyncpa %s603, 1

</llo_original>
